<compile_context>
chip_gen: v5e
topology: v5e:2x2
jax: 0.10.0
libtpu: 0.0.40
codegen_flags: <defaults>
</compile_context>

<pallas_src>
import jax
import jax.numpy as jnp
from jax.experimental import pallas as pl
from jax.experimental.pallas import tpu as pltpu

_LANES = 128                     # vreg lane width
# ~6 MiB of input (3 channel planes) per grid step -> ~2 MiB output block,
# ~16 MiB total double-buffered.  Comfortably under the explicit 48 MiB
# scoped-VMEM limit on every generation (v7x physical VMEM is 64 MiB).
_TILE_IN_BYTES = 6 * 1024 * 1024
_VMEM_LIMIT_BYTES = 48 << 20


def _cdiv(a: int, b: int) -> int:
    return -(-a // b)


def _round_up(x: int, m: int) -> int:
    return _cdiv(x, m) * m


def _sublane_multiple(dtype) -> int:
    # 32-bit -> 8, 16-bit -> 16, 8-bit -> 32 (sub-32-bit dtypes pack sublanes).
    bits = jnp.dtype(dtype).itemsize * 8
    return max(8, 256 // bits)


def _make_gray_kernel(w0: float, w1: float, w2: float):
    # Weights are compile-time constants (closure): exactly 2 mul + 2 add +
    # (optional) casts per vreg, no SMEM traffic.
    def kernel(x_ref, o_ref):
        # x_ref: (TB, 3, TR, 128), o_ref: (TB, 1, TR, 128)
        r = x_ref[:, 0, :, :].astype(jnp.float32)
        g = x_ref[:, 1, :, :].astype(jnp.float32)
        b = x_ref[:, 2, :, :].astype(jnp.float32)
        o_ref[:, 0, :, :] = (w0 * r + w1 * g + w2 * b).astype(o_ref.dtype)

    return kernel


def rgb_to_grayscale_pallas(image: jax.Array,
                            rgb_weights=(0.299, 0.587, 0.114)) -> jax.Array:
    """image: (*, 3, H, W). Returns (*, 1, H, W) = w0*R + w1*G + w2*B."""
    if image.ndim < 3 or image.shape[-3] != 3:
        raise ValueError(f"Input must have shape (*, 3, H, W). Got {image.shape}")
    # NOTE: weights are frozen at trace time (Python floats); passing a traced
    # array for rgb_weights inside jit is not supported.
    w = [float(v) for v in jnp.asarray(rgb_weights, dtype=jnp.float32).reshape(-1)]
    if len(w) != 3:
        raise ValueError(f"rgb_weights must have 3 elements. Got {rgb_weights}")
    w0, w1, w2 = w

    # kornia only warns on non-float images; upcast so the weighted sum is
    # numerically meaningful on TPU.
    if not jnp.issubdtype(image.dtype, jnp.floating):
        image = image.astype(jnp.float32)

    lead = image.shape[:-3]
    H, W = image.shape[-2], image.shape[-1]
    B = 1
    for d in lead:
        B *= d
    HW = H * W

    # Lane-dense re-tiling: each channel plane -> (rows, 128).  Pad HW only to
    # the next multiple of 128, and only when actually needed.
    rows = _cdiv(HW, _LANES)
    hw_pad = rows * _LANES
    x = image.reshape(B, 3, HW)
    if hw_pad != HW:
        x = jnp.pad(x, ((0, 0), (0, 0), (0, hw_pad - HW)))
    x = x.reshape(B, 3, rows, _LANES)

    itemsize = jnp.dtype(x.dtype).itemsize
    sub = _sublane_multiple(x.dtype)
    max_tile_rows = max(sub, (_TILE_IN_BYTES // (3 * _LANES * itemsize)) // sub * sub)

    if rows <= max_tile_rows:
        if B == 1 and rows >= 2 * sub:
            # Guarantee >=2 grid steps so v7x's two TensorCores both get work
            # even for a single image (each TC has its own HBM path).
            tile_rows = _round_up(_cdiv(rows, 2), sub)
        else:
            tile_rows = rows  # full dim (allowed even if not sublane-aligned)
    else:
        tile_rows = max_tile_rows
    num_row_tiles = _cdiv(rows, tile_rows)

    if num_row_tiles == 1:
        # Fold batch elements per block to amortize ~0.35us/step overhead
        # (planes are contiguous since rows are unpadded), but keep >=2 batch
        # blocks when B >= 2 so the parallel axis can shard across v7x's TCs.
        tile_b = max(1, min(B, max_tile_rows // tile_rows))
        if B >= 2:
            tile_b = min(tile_b, _cdiv(B, 2))
    else:
        tile_b = 1
    grid = (_cdiv(B, tile_b), num_row_tiles)

    out4 = pl.pallas_call(
        _make_gray_kernel(w0, w1, w2),
        out_shape=jax.ShapeDtypeStruct((B, 1, rows, _LANES), image.dtype),
        grid=grid,
        in_specs=[
            pl.BlockSpec((tile_b, 3, tile_rows, _LANES),
                         lambda b, t: (b, 0, t, 0)),
        ],
        out_specs=pl.BlockSpec((tile_b, 1, tile_rows, _LANES),
                               lambda b, t: (b, 0, t, 0)),
        compiler_params=pltpu.CompilerParams(
            # Both axes are independent -> shard across v7x's 2 TensorCores.
            dimension_semantics=("parallel", "parallel"),
            vmem_limit_bytes=_VMEM_LIMIT_BYTES,
        ),
    )(x)

    out = out4.reshape(B, 1, hw_pad)
    if hw_pad != HW:
        out = out[:, :, :HW]
    return out.reshape(*lead, 1, H, W)


class RgbToGrayscale:
    """JAX/Pallas port of kornia RgbToGrayscale (forward only)."""

    def __init__(self, rgb_weights=None):
        if rgb_weights is None:
            rgb_weights = (0.299, 0.587, 0.114)
        self.rgb_weights = tuple(
            float(v) for v in jnp.asarray(rgb_weights, dtype=jnp.float32).reshape(-1)
        )

    def __call__(self, image: jax.Array) -> jax.Array:
        return rgb_to_grayscale_pallas(image, self.rgb_weights)


if __name__ == "__main__":
    key = jax.random.PRNGKey(0)
    module = RgbToGrayscale()
    w0, w1, w2 = module.rgb_weights

    # Small batched case: 128-aligned HW (no pad, no slice), batch-axis grid.
    x = jax.random.uniform(key, (2, 3, 16, 16), dtype=jnp.float32)
    y = jax.block_until_ready(module(x))
    ref = w0 * x[:, 0:1] + w1 * x[:, 1:2] + w2 * x[:, 2:3]
    assert y.shape == (2, 1, 16, 16), y.shape
    assert jnp.allclose(y, ref, atol=1e-6, rtol=1e-6)

    # Non-128-aligned spatial size exercises the (only-when-needed) pad path.
    x2 = jax.random.uniform(jax.random.fold_in(key, 1), (1, 3, 17, 19),
                            dtype=jnp.float32)
    y2 = jax.block_until_ready(module(x2))
    ref2 = w0 * x2[:, 0:1] + w1 * x2[:, 1:2] + w2 * x2[:, 2:3]
    assert y2.shape == (1, 1, 17, 19), y2.shape
    assert jnp.allclose(y2, ref2, atol=1e-6, rtol=1e-6)

    # B==1 row-split path (2 grid steps for TC sharding) with a ragged final
    # row tile; HW % 128 == 0 so the host side is pure reshapes.
    x3 = jax.random.uniform(jax.random.fold_in(key, 2), (1, 3, 128, 130),
                            dtype=jnp.float32)
    y3 = jax.block_until_ready(module(x3))
    ref3 = w0 * x3[:, 0:1] + w1 * x3[:, 1:2] + w2 * x3[:, 2:3]
    assert y3.shape == (1, 1, 128, 130), y3.shape
    assert jnp.allclose(y3, ref3, atol=1e-6, rtol=1e-6)

    # bf16: dtype-aware sublane multiple, compute in f32, cast on store.
    x4 = jax.random.uniform(jax.random.fold_in(key, 3),
                            (2, 3, 32, 32)).astype(jnp.bfloat16)
    y4 = jax.block_until_ready(module(x4))
    ref4 = (w0 * x4[:, 0:1].astype(jnp.float32)
            + w1 * x4[:, 1:2].astype(jnp.float32)
            + w2 * x4[:, 2:3].astype(jnp.float32)).astype(jnp.bfloat16)
    assert y4.shape == (2, 1, 32, 32), y4.shape
    assert y4.dtype == jnp.bfloat16, y4.dtype
    assert jnp.allclose(y4.astype(jnp.float32), ref4.astype(jnp.float32),
                        atol=2e-2, rtol=2e-2)

    print("KERNEL_OK")
</pallas_src>

<mosaic_0001>
module attributes {stable_mosaic.version = 11 : i64} {
  func.func @kernel(%arg0: i32, %arg1: i32, %arg2: memref<1x3x2x128xf32, #tpu.memory_space<vmem>>, %arg3: memref<1x1x2x128xf32, #tpu.memory_space<vmem>>) attributes {dimension_semantics = [#tpu.dimension_semantics<parallel>, #tpu.dimension_semantics<parallel>], iteration_bounds = array<i64: 2, 1>, scalar_prefetch = 0 : i64, scratch_operands = 0 : i64, tpu.core_type = #tpu.core_type<tc>, window_params = [{transform_indices = @transform_0, window_bounds = array<i64: 1, 3, 2, 128>}, {transform_indices = @transform_1, window_bounds = array<i64: 1, 1, 2, 128>}]} {
    %c0 = arith.constant 0 : index
    %c0_0 = arith.constant 0 : index
    %c0_1 = arith.constant 0 : index
    %c0_2 = arith.constant 0 : index
    %0 = vector.load %arg2[%c0, %c0_0, %c0_1, %c0_2] : memref<1x3x2x128xf32, #tpu.memory_space<vmem>>, vector<1x1x2x128xf32>
    %1 = vector.shape_cast %0 : vector<1x1x2x128xf32> to vector<1x2x128xf32>
    %c0_3 = arith.constant 0 : index
    %c1 = arith.constant 1 : index
    %c0_4 = arith.constant 0 : index
    %c0_5 = arith.constant 0 : index
    %2 = vector.load %arg2[%c0_3, %c1, %c0_4, %c0_5] : memref<1x3x2x128xf32, #tpu.memory_space<vmem>>, vector<1x1x2x128xf32>
    %3 = vector.shape_cast %2 : vector<1x1x2x128xf32> to vector<1x2x128xf32>
    %c0_6 = arith.constant 0 : index
    %c2 = arith.constant 2 : index
    %c0_7 = arith.constant 0 : index
    %c0_8 = arith.constant 0 : index
    %4 = vector.load %arg2[%c0_6, %c2, %c0_7, %c0_8] : memref<1x3x2x128xf32, #tpu.memory_space<vmem>>, vector<1x1x2x128xf32>
    %5 = vector.shape_cast %4 : vector<1x1x2x128xf32> to vector<1x2x128xf32>
    %cst = arith.constant 2.990000e-01 : f32
    %6 = vector.broadcast %cst : f32 to vector<1x2x128xf32>
    %7 = arith.mulf %6, %1 : vector<1x2x128xf32>
    %cst_9 = arith.constant 5.870000e-01 : f32
    %8 = vector.broadcast %cst_9 : f32 to vector<1x2x128xf32>
    %9 = arith.mulf %8, %3 : vector<1x2x128xf32>
    %10 = arith.addf %7, %9 : vector<1x2x128xf32>
    %cst_10 = arith.constant 1.140000e-01 : f32
    %11 = vector.broadcast %cst_10 : f32 to vector<1x2x128xf32>
    %12 = arith.mulf %11, %5 : vector<1x2x128xf32>
    %13 = arith.addf %10, %12 : vector<1x2x128xf32>
    %c0_11 = arith.constant 0 : index
    %c0_12 = arith.constant 0 : index
    %c0_13 = arith.constant 0 : index
    %c0_14 = arith.constant 0 : index
    %14 = vector.load %arg3[%c0_11, %c0_12, %c0_13, %c0_14] : memref<1x1x2x128xf32, #tpu.memory_space<vmem>>, vector<1x1x2x128xf32>
    %15 = vector.shape_cast %14 : vector<1x1x2x128xf32> to vector<1x2x128xf32>
    %16 = vector.shape_cast %13 : vector<1x2x128xf32> to vector<1x1x2x128xf32>
    tpu.vector_store %arg3[%c0_11, %c0_12, %c0_13, %c0_14], %16 {strides = array<i32>} : memref<1x1x2x128xf32, #tpu.memory_space<vmem>>, vector<1x1x2x128xf32>,
    return
  }
  func.func @transform_0(%arg0: i32, %arg1: i32) -> (i32, i32, i32, i32) {
    %c0_i32 = arith.constant 0 : i32
    %c0_i32_0 = arith.constant 0 : i32
    %c0_i32_1 = arith.constant 0 : i32
    return %arg0, %c0_i32, %arg1, %c0_i32_0 : i32, i32, i32, i32
  }
  func.func @transform_1(%arg0: i32, %arg1: i32) -> (i32, i32, i32, i32) {
    %c0_i32 = arith.constant 0 : i32
    %c0_i32_0 = arith.constant 0 : i32
    %c0_i32_1 = arith.constant 0 : i32
    return %arg0, %c0_i32, %arg1, %c0_i32_0 : i32, i32, i32, i32
  }
}

</mosaic_0001>

<llo_original>
// kernel: tpu_custom_call.1
$region0: #{tpu_custom_call.1}
  #allocation0 [shape = 'u32[]', space=smem, size = 0x4, offset = 0x4, fixed_abs, tag = 'smem constant byte address 0x4 - core index']
  #allocation1 [shape = 'u32[72,128]{1,0:T(1,128)}', space=vmem, size = 0x9000, scoped, tag = 'internal scratch']
  %s0 = inlined_call_operand.hbm [shape: f32[2,3,2,128], index: 0, kind: input, shape index: {}]
  %s1 = inlined_call_operand.hbm [shape: f32[2,1,2,128], index: 1, kind: output, shape index: {}]
  %s2 = sld [smem:[#allocation0]]
  $region41: #{tpu_custom_call.1} parent=0
    _
  %s4 = ssub.s32 1, %s2
  %s5 = scalar_select 0, %s4, %s2
  $region1: #{tpu_custom_call.1} parent=0
    #allocation2 [shape = 'u8[6144]{0}', space=vmem, size = 0x1800, scoped, tag = 'input window, operand 0']
    #allocation3 [shape = 's32[2]{0}', space=sflag, size = 0x8, scoped, tag = 'scoped memory for tpu_custom_call.1']
    #allocation4 [shape = 's32[2]{0}', space=sflag, size = 0x8, scoped, tag = 'scoped memory for tpu_custom_call.1']
    #allocation5 [shape = 'u8[2048]{0}', space=vmem, size = 0x800, scoped, tag = 'output window, operand 0']
    %6 = vsyncpa [#allocation3], 0
    %s7 = scalar_lea.sflag [#allocation3], 1
    %8 = vsyncpa %s7, 0
    %9 = vsyncpa [#allocation4], 0
    %s10 = scalar_lea.sflag [#allocation4], 1
    %11 = vsyncpa %s10, 0
    loop: start=0, step=1, limit=4
    $region2: #{tpu_custom_call.1} parent=1 // loop_pre_header
      _
    $region3: #{tpu_custom_call.1} parent=1 // loop_header
      %s13 = sphi 0, %s17
      %p14 = scmp.ge.s32.totalorder %s13, 4
      %s20 = sphi 0, %s32
      %s21 = sphi 0, %s28
      %s22 = sphi 0, %s20
      %s23 = sphi 0, %s21
      %s24 = sphi 0, %s22
      %s25 = sphi 0, %s23
      %s37 = sphi 0, %s39
      %s40 = sphi 0, %s37
      %s41 = sphi 0, %s40
      %s57 = sphi 0, %s41
      %s65 = sphi 0, %s67
      %s68 = sphi 0, %s65
      %s69 = sphi 0, %s68
      %s85 = sphi 0, %s69
    $region4: #{tpu_custom_call.1} parent=1 // loop_header_branch
      %16 = sbr.rel (%p14) target = $region8
    $region5: #{tpu_custom_call.1} parent=1 // loop_body
      %s18 = ssub.s32 %s13, 1
      %s19 = ssub.s32 %s13, 2
      %s26 = sadd.s32 1, %s21
      %p27 = scmp.ge.s32.totalorder %s26, 1
      %s28 = scalar_select %p27, 0, %s26
      %s29 = sadd.s32 1, %s20
      %s30 = scalar_select %p27, %s29, %s20
      %p31 = scmp.ge.s32.totalorder %s30, 2
      %s32 = scalar_select %p31, 0, %s30
      %s33 = ssub.s32 %s20, %s32
      %s34 = ssub.s32 %s21, %s28
      %s35 = sor.u32 %s33, %s34
      %p36 = scmp.eq.s32.totalorder %s35, 0
      %s38 = sadd.s32 %s37, 1
      %s39 = scalar_select %p36, %s37, %s38
      %p42 = pneg %p36
      %p43 = scmp.eq.s32.totalorder %s13, 1
      %p44 = por %p42, %p43
      %p45 = scmp.ne.s32.totalorder %s37, %s40
      %p46 = scmp.eq.s32.totalorder %s13, 0
      %p47 = por %p45, %p46
      %p48 = scmp.ne.s32.totalorder %s37, %s40
      %p49 = scmp.eq.s32.totalorder %s18, 1
      %p50 = por %p48, %p49
      %p51 = scmp.ne.s32.totalorder %s40, %s41
      %p52 = scmp.eq.s32.totalorder %s18, 0
      %p53 = por %p51, %p52
      %p54 = scmp.ne.s32.totalorder %s40, %s41
      %p55 = scmp.eq.s32.totalorder %s19, 1
      %p56 = por %p54, %p55
      %p58 = scmp.ne.s32.totalorder %s41, %s57
      %p59 = scmp.eq.s32.totalorder %s19, 0
      %p60 = por %p58, %p59
      %s61 = ssub.s32 %s20, %s32
      %s62 = ssub.s32 %s21, %s28
      %s63 = sor.u32 %s61, %s62
      %p64 = scmp.eq.s32.totalorder %s63, 0
      %s66 = sadd.s32 %s65, 1
      %s67 = scalar_select %p64, %s65, %s66
      %p70 = pneg %p64
      %p71 = scmp.eq.s32.totalorder %s13, 1
      %p72 = por %p70, %p71
      %p73 = scmp.ne.s32.totalorder %s65, %s68
      %p74 = scmp.eq.s32.totalorder %s13, 0
      %p75 = por %p73, %p74
      %p76 = scmp.ne.s32.totalorder %s65, %s68
      %p77 = scmp.eq.s32.totalorder %s18, 1
      %p78 = por %p76, %p77
      %p79 = scmp.ne.s32.totalorder %s68, %s69
      %p80 = scmp.eq.s32.totalorder %s18, 0
      %p81 = por %p79, %p80
      %p82 = scmp.ne.s32.totalorder %s68, %s69
      %p83 = scmp.eq.s32.totalorder %s19, 1
      %p84 = por %p82, %p83
      %p86 = scmp.ne.s32.totalorder %s69, %s85
      %p87 = scmp.eq.s32.totalorder %s19, 0
      %p88 = por %p86, %p87
      %p89 = scmp.le.s32.totalorder 1, %s13
      %p90 = scmp.lt.s32.totalorder %s13, 3
      %p91 = pnand %p89, %p90
      %p92 = pneg %p91
      // Predicated region
      $region9: #{tpu_custom_call.1} parent=5 // pred_check
        _
      $region10: #{tpu_custom_call.1} parent=5 // pred_check_branch
        %94 = sbr.rel (%p91) target = $region12
      $region11: #{tpu_custom_call.1} parent=5 // pred_region
        %s95 = ssub.s32 %s13, 1
      $region12: #{tpu_custom_call.1} parent=5 // pred_fallthru
        _
      %p96 = scmp.lt.s32.totalorder %s13, 2
      // Predicated region
      $region13: #{tpu_custom_call.1} parent=5 // pred_check
        %p97 = pneg %p96
      $region14: #{tpu_custom_call.1} parent=5 // pred_check_branch
        %99 = sbr.rel (%p97) target = $region16
      $region15: #{tpu_custom_call.1} parent=5 // pred_region
        // Predicated region
        $region17: #{tpu_custom_call.1} parent=15 // pred_check
          %p100 = pneg %p47
        $region18: #{tpu_custom_call.1} parent=15 // pred_check_branch
          %102 = sbr.rel (%p100) target = $region20
        $region19: #{tpu_custom_call.1} parent=15 // pred_region
          %s103 = sand.u32 %s37, 1
          %s104 = scalar_lea.sflag [#allocation3], %s103
          %s105 = sand.u32 %s37, 1
          %s106 = smul.addr %s105, 6
          %s107 = scalar_lea.vmem [#allocation2], %s106
          %109 = vsyncadd %s104, 0
          %s110 = smul.addr %s20, 3
          %s111 = sadd.s32 %s21, %s110
          %s112 = smul.addr %s111, 2
          %s113 = scalar_lea.hbm %s0, %s112
          %s114 = sshll.u32 %s113, 4
          %s115 = int_to_ptr.hbm [resolvable:$true] %s114
          %s116 = sshll.u32 %s107, 4
          %s117 = int_to_ptr.vmem [resolvable:$true] %s116
          %122 = dma.hbm_to_vmem [thread:$0]  %s115, 96, %s117, %s104, 32, 32, 2
        $region20: #{tpu_custom_call.1} parent=15 // pred_fallthru
          _
      $region16: #{tpu_custom_call.1} parent=5 // pred_fallthru
        _
      %p123 = scmp.le.s32.totalorder 1, %s13
      %p124 = scmp.lt.s32.totalorder %s13, 3
      %p125 = pnand %p123, %p124
      %p126 = pneg %p125
      // Predicated region
      $region21: #{tpu_custom_call.1} parent=5 // pred_check
        _
      $region22: #{tpu_custom_call.1} parent=5 // pred_check_branch
        %128 = sbr.rel (%p125) target = $region24
      $region23: #{tpu_custom_call.1} parent=5 // pred_region
        %s129 = ssub.s32 %s13, 1
        %s130 = sand.u32 %s40, 1
        %s131 = scalar_lea.sflag [#allocation3], %s130
        %s132 = sand.u32 %s40, 1
        %s133 = smul.addr %s132, 6
        %s134 = scalar_lea.vmem [#allocation2], %s133
        // Predicated region
        $region25: #{tpu_custom_call.1} parent=23 // pred_check
          %p135 = pneg %p53
        $region26: #{tpu_custom_call.1} parent=23 // pred_check_branch
          %137 = sbr.rel (%p135) target = $region28
        $region27: #{tpu_custom_call.1} parent=23 // pred_region
          %139 = dma.done %s131, 96
        $region28: #{tpu_custom_call.1} parent=23 // pred_fallthru
          _
        %s140 = sand.u32 %s40, 1
        %s141 = scalar_lea.sflag [#allocation3], %s140
        %s142 = sand.u32 %s40, 1
        %s143 = smul.addr %s142, 6
        %s144 = scalar_lea.vmem [#allocation2], %s143
        %p145 = pneg %p53
        %p146 = pneg %p50
        %p147 = pneg %p81
        %p148 = pneg %p78
        %s149 = sand.u32 %s68, 1
        %s150 = scalar_lea.sflag [#allocation4], %s149
        %s151 = sand.u32 %s68, 1
        %s152 = smul.addr %s151, 2
        %s153 = scalar_lea.vmem [#allocation5], %s152
        %v154 = vld [vmem:[%s134] sm:$0x3]
        %s155 = scalar_lea.vmem %s134, 2 [#allocation2]
        %v156 = vld [vmem:[%s155] sm:$0x3]
        %s157 = scalar_lea.vmem %s134, 4 [#allocation2]
        %v158 = vld [vmem:[%s157] sm:$0x3]
        %v159 = vmul.f32 %v154, 0.299
        %v160 = vmul.f32 %v156, 0.587
        %v161 = vadd.f32 %v159, %v160
        %v162 = vmul.f32 %v158, 0.114
        %v163 = vadd.f32 %v161, %v162
        %164 = vst [vmem:[%s153] sm:$0x3] %v163
        %s165 = sand.u32 %s68, 1
        %s166 = scalar_lea.sflag [#allocation4], %s165
        %s167 = sand.u32 %s68, 1
        %s168 = smul.addr %s167, 2
        %s169 = scalar_lea.vmem [#allocation5], %s168
        // Predicated region
        $region29: #{tpu_custom_call.1} parent=23 // pred_check
          %p170 = pneg %p78
        $region30: #{tpu_custom_call.1} parent=23 // pred_check_branch
          %172 = sbr.rel (%p170) target = $region32
        $region31: #{tpu_custom_call.1} parent=23 // pred_region
          %174 = vsyncadd %s166, 0
          %s175 = sadd.s32 %s23, %s22
          %s176 = smul.addr %s175, 2
          %s177 = scalar_lea.hbm %s1, %s176
          %s179 = sshll.u32 %s169, 4
          %s180 = int_to_ptr.vmem [resolvable:$true] %s179
          %s181 = sshll.u32 %s177, 4
          %s182 = int_to_ptr.hbm [resolvable:$true] %s181
          %184 = dma.vmem_to_hbm [thread:$0]  %s180, 32, %s182, %s166
        $region32: #{tpu_custom_call.1} parent=23 // pred_fallthru
          _
      $region24: #{tpu_custom_call.1} parent=5 // pred_fallthru
        _
      %p185 = scmp.le.s32.totalorder 2, %s13
      // Predicated region
      $region33: #{tpu_custom_call.1} parent=5 // pred_check
        %p186 = pneg %p185
      $region34: #{tpu_custom_call.1} parent=5 // pred_check_branch
        %188 = sbr.rel (%p186) target = $region36
      $region35: #{tpu_custom_call.1} parent=5 // pred_region
        %s189 = ssub.s32 %s13, 2
        // Predicated region
        $region37: #{tpu_custom_call.1} parent=35 // pred_check
          %p190 = pneg %p84
        $region38: #{tpu_custom_call.1} parent=35 // pred_check_branch
          %192 = sbr.rel (%p190) target = $region40
        $region39: #{tpu_custom_call.1} parent=35 // pred_region
          %s193 = sand.u32 %s69, 1
          %s194 = scalar_lea.sflag [#allocation4], %s193
          %s195 = sand.u32 %s69, 1
          %s196 = smul.addr %s195, 2
          %s197 = scalar_lea.vmem [#allocation5], %s196
          %199 = dma.done %s194, 32
        $region40: #{tpu_custom_call.1} parent=35 // pred_fallthru
          _
      $region36: #{tpu_custom_call.1} parent=5 // pred_fallthru
        _
    $region6: #{tpu_custom_call.1} parent=1 // loop_footer
      %s17 = sadd.s32 1, %s13
    $region7: #{tpu_custom_call.1} parent=1 // loop_footer_branch
      %12 = sbr.rel target = $region3
    $region8: #{tpu_custom_call.1} parent=1 // loop_exit
      _
    %200 = vsyncpa [#allocation3], 1
    %s201 = scalar_lea.sflag [#allocation3], 1
    %202 = vsyncpa %s201, 1
    %203 = vsyncpa [#allocation4], 1
    %s204 = scalar_lea.sflag [#allocation4], 1
    %205 = vsyncpa %s204, 1

</llo_original>
